<compile_context>
chip_gen: v7x
topology: tpu7x:2x2x1
jax: 0.10.0
libtpu: 0.0.40
codegen_flags: <defaults>
</compile_context>

<pallas_src>
import jax
import jax.numpy as jnp
from jax import lax
from jax.experimental import pallas as pl
from jax.experimental.pallas import tpu as pltpu

SELU_ALPHA = 1.6732632423543772
SELU_SCALE = 1.0507009873554804


def _selu_unscaled(x):
    # SELU with the outer scale folded into the *next* layer's weights:
    # where(x > 0, x, alpha*exp(x) - alpha)  -> exp (EUP), mul, sub, cmp, select.
    return jnp.where(x > 0, x, SELU_ALPHA * jnp.exp(x) - SELU_ALPHA)


def fcdp_kernel(x_ref, w1_ref, b1_ref, w2_ref, b2_ref, w3_ref, b3_ref,
                hr_ref, mid_ref, o_ref):
    # x_ref: (TB, input_dim) natural layout.  Contract the feature axis of BOTH
    # operands so the result is already feature-major (H1, TB); the MXU does the
    # "transpose", no data movement in the wrapper.
    dn = (((1,), (1,)), ((), ()))
    h = lax.dot_general(w1_ref[...], x_ref[...], dimension_numbers=dn,
                        preferred_element_type=jnp.float32) + b1_ref[...]
    h = _selu_unscaled(h)            # SELU scale folded into w2

    # hidden layer + SELU              (H2, H1) @ (H1, TB) -> (H2, TB)
    h = jnp.dot(w2_ref[...], h, preferred_element_type=jnp.float32) + b2_ref[...]
    h = _selu_unscaled(h)            # SELU scale folded into w3

    # output layer + tanh              (A, H2) @ (H2, TB) -> (A, TB)
    y = jnp.dot(w3_ref[...], h, preferred_element_type=jnp.float32) + b3_ref[...]
    y = jnp.tanh(y)

    # rescale [-1, 1] -> [act_min, act_max]: one FMA, lane-dense store.
    o_ref[...] = y * hr_ref[...] + mid_ref[...]


def _round_up(n, m):
    return -(-n // m) * m


_TB_CANDIDATES = (8192, 4096, 2048, 1024, 512, 256, 128)


def _max_batch_tile(input_dim, hidden_dims, action_dim, budget_bytes=20 * 1024 * 1024):
    """Largest batch tile the VMEM budget allows (conservative, all generations).

    Approx bytes per batch element of tile:
      x tile (double-buffered, lane-padded to 128) + ~4 live (H, TB) f32 temporaries
      + output tile (double-buffered, sublane-padded to 8).
    """
    per_elem = 4 * (2 * _round_up(input_dim, 128)
                    + 4 * max(hidden_dims)
                    + 2 * _round_up(action_dim, 8))
    return max(128, min(_TB_CANDIDATES[0], (budget_bytes // per_elem) // 128 * 128))


def _batch_tiling(B, max_tb):
    """Pick (tile, padded_batch).

    Tile is a multiple of 128 (lane-dense), as large as the VMEM budget allows to
    amortise the ~0.35 us per-grid-step overhead, keeps >= 2 grid steps when the
    batch is big enough (so v7x's two TensorCores both get work), and caps padding
    waste at ~6%.
    """
    bp128 = max(128, _round_up(B, 128))
    if bp128 <= 2 * 128:
        return bp128, bp128                 # tiny batch: single lane-dense tile
    for tb in _TB_CANDIDATES:
        if tb > max_tb or tb > bp128 // 2:  # respect VMEM budget; keep >= 2 steps
            continue
        bp = _round_up(B, tb)
        if (bp - B) * 16 <= B:              # <= ~6% padding waste
            return tb, bp
    return 128, bp128


def fcdp_forward(x, kparams, *, batch_major_out=False):
    """FCDP forward.  x: (B, input_dim) float32.  kparams: from prepare_params.

    Returns the actions FEATURE-MAJOR, shape (action_dim, B): the kernel's output
    store has batch on the lane axis, so returning this layout avoids an extra
    read+write transpose pass over HBM.  Pass batch_major_out=True for the
    PyTorch-style (B, action_dim) layout.
    """
    w1, b1 = kparams["w1"], kparams["b1"]
    w2, b2 = kparams["w2"], kparams["b2"]
    w3, b3 = kparams["w3"], kparams["b3"]
    hr, mid = kparams["half_range"], kparams["mid"]

    B, input_dim = x.shape
    H1, H2, A = w1.shape[0], w2.shape[0], w3.shape[0]

    tb, bp = _batch_tiling(B, _max_batch_tile(input_dim, (H1, H2), A))
    if bp != B:
        x = jnp.pad(x, ((0, bp - B), (0, 0)))   # only when B isn't tile-aligned
    grid = (bp // tb,)

    def resident(arr):
        # Weights / biases / bounds: same block every grid step -> fetched once,
        # stay VMEM-resident across the whole grid.
        return pl.BlockSpec(arr.shape, lambda i: (0, 0))

    param_bytes = 4 * sum(p.size for p in (w1, b1, w2, b2, w3, b3, hr, mid))
    cost = pl.CostEstimate(
        flops=2 * bp * (input_dim * H1 + H1 * H2 + H2 * A),
        transcendentals=bp * (H1 + H2 + A),           # SELU exps + tanh
        bytes_accessed=4 * bp * (input_dim + A) + param_bytes,
    )

    out = pl.pallas_call(
        fcdp_kernel,
        out_shape=jax.ShapeDtypeStruct((A, bp), jnp.float32),
        grid=grid,
        in_specs=[
            pl.BlockSpec((tb, input_dim), lambda i: (i, 0)),   # natural x layout
            resident(w1), resident(b1),
            resident(w2), resident(b2),
            resident(w3), resident(b3),
            resident(hr), resident(mid),
        ],
        out_specs=pl.BlockSpec((A, tb), lambda i: (0, i)),     # lane-dense store
        compiler_params=pltpu.CompilerParams(
            dimension_semantics=("parallel",),         # shard batch across TCs (v7x)
            vmem_limit_bytes=32 * 1024 * 1024,         # v5e default scoped is 16 MiB
        ),
        cost_estimate=cost,
    )(x, w1, b1, w2, b2, w3, b3, hr, mid)

    if bp != B:
        out = out[:, :B]
    if batch_major_out:
        out = out.T
    return out


def init_params(key, input_dim, hidden_dims, action_bounds):
    """Deterministic synthetic init (PyTorch-Linear-style uniform fan-in bounds).

    Returns PyTorch-native params: w (out_features, in_features), b (out_features,),
    plus act_min / act_max vectors.
    """
    act_min = jnp.asarray(action_bounds[0], jnp.float32)
    act_max = jnp.asarray(action_bounds[1], jnp.float32)
    action_dim = act_max.shape[0]
    dims = [input_dim] + list(hidden_dims) + [action_dim]
    params = {"act_min": act_min, "act_max": act_max}
    for n, (din, dout) in enumerate(zip(dims[:-1], dims[1:]), start=1):
        key, kw, kb = jax.random.split(key, 3)
        bound = 1.0 / float(din) ** 0.5
        params[f"w{n}"] = jax.random.uniform(kw, (dout, din), jnp.float32, -bound, bound)
        params[f"b{n}"] = jax.random.uniform(kb, (dout,), jnp.float32, -bound, bound)
    return params


def prepare_params(params):
    """Kernel-ready params: SELU scale folded into the downstream weights, biases as
    (out, 1) columns for the feature-major kernel, rescale as (half_range, mid)."""
    act_min = params["act_min"].reshape(-1, 1)
    act_max = params["act_max"].reshape(-1, 1)
    return {
        "w1": params["w1"],
        "b1": params["b1"].reshape(-1, 1),
        "w2": params["w2"] * SELU_SCALE,      # absorbs scale of SELU after layer 1
        "b2": params["b2"].reshape(-1, 1),
        "w3": params["w3"] * SELU_SCALE,      # absorbs scale of SELU after layer 2
        "b3": params["b3"].reshape(-1, 1),
        "half_range": 0.5 * (act_max - act_min),   # (A, 1)
        "mid": 0.5 * (act_max + act_min),          # (A, 1)
    }


def _reference_forward(x, params):
    """Pure-JAX reference with the original (unfused) PyTorch math."""
    def selu(v):
        return SELU_SCALE * jnp.where(v > 0, v, SELU_ALPHA * (jnp.exp(v) - 1.0))
    h = selu(x @ params["w1"].T + params["b1"])
    h = selu(h @ params["w2"].T + params["b2"])
    y = jnp.tanh(h @ params["w3"].T + params["b3"])
    act_min, act_max = params["act_min"], params["act_max"]
    # rescale_fn with nn_min = tanh(-inf) = -1, nn_max = tanh(+inf) = +1
    return (y + 1.0) * (act_max - act_min) / 2.0 + act_min


if __name__ == "__main__":
    key = jax.random.PRNGKey(0)
    key, kx = jax.random.split(key)

    batch = 2
    input_dim = 16
    hidden_dims = (32, 32)
    action_bounds = ([-2.0, -1.0, 0.0, -0.5], [2.0, 1.0, 3.0, 0.5])  # action_dim = 4

    params = init_params(key, input_dim, hidden_dims, action_bounds)
    kparams = prepare_params(params)
    x = jax.random.normal(kx, (batch, input_dim), jnp.float32)

    out = fcdp_forward(x, kparams)          # feature-major: (action_dim, batch)
    jax.block_until_ready(out)

    action_dim = len(action_bounds[0])
    assert out.shape == (action_dim, batch)
    assert out.dtype == jnp.float32

    ref = _reference_forward(x, params)     # (batch, action_dim), original math
    assert jnp.allclose(out.T, ref, atol=1e-5, rtol=1e-5)

    print("KERNEL_OK")
</pallas_src>

<mosaic_0001>
module attributes {stable_mosaic.version = 11 : i64} {
  func.func @fcdp_kernel(%arg0: i32, %arg1: memref<128x16xf32, #tpu.memory_space<vmem>>, %arg2: memref<32x16xf32, #tpu.memory_space<vmem>>, %arg3: memref<32x1xf32, #tpu.memory_space<vmem>>, %arg4: memref<32x32xf32, #tpu.memory_space<vmem>>, %arg5: memref<32x1xf32, #tpu.memory_space<vmem>>, %arg6: memref<4x32xf32, #tpu.memory_space<vmem>>, %arg7: memref<4x1xf32, #tpu.memory_space<vmem>>, %arg8: memref<4x1xf32, #tpu.memory_space<vmem>>, %arg9: memref<4x1xf32, #tpu.memory_space<vmem>>, %arg10: memref<4x128xf32, #tpu.memory_space<vmem>>) attributes {dimension_semantics = [#tpu.dimension_semantics<parallel>], iteration_bounds = array<i64: 1>, scalar_prefetch = 0 : i64, scratch_operands = 0 : i64, tpu.core_type = #tpu.core_type<tc>, window_params = [{transform_indices = @transform_0, window_bounds = array<i64: 128, 16>}, {pipeline_mode = #tpu.pipeline_mode<synchronous>, transform_indices = @transform_1, window_bounds = array<i64: 32, 16>}, {pipeline_mode = #tpu.pipeline_mode<synchronous>, transform_indices = @transform_2, window_bounds = array<i64: 32, 1>}, {pipeline_mode = #tpu.pipeline_mode<synchronous>, transform_indices = @transform_3, window_bounds = array<i64: 32, 32>}, {pipeline_mode = #tpu.pipeline_mode<synchronous>, transform_indices = @transform_4, window_bounds = array<i64: 32, 1>}, {pipeline_mode = #tpu.pipeline_mode<synchronous>, transform_indices = @transform_5, window_bounds = array<i64: 4, 32>}, {pipeline_mode = #tpu.pipeline_mode<synchronous>, transform_indices = @transform_6, window_bounds = array<i64: 4, 1>}, {pipeline_mode = #tpu.pipeline_mode<synchronous>, transform_indices = @transform_7, window_bounds = array<i64: 4, 1>}, {pipeline_mode = #tpu.pipeline_mode<synchronous>, transform_indices = @transform_8, window_bounds = array<i64: 4, 1>}, {transform_indices = @transform_9, window_bounds = array<i64: 4, 128>}]} {
    %c0 = arith.constant 0 : index
    %c0_0 = arith.constant 0 : index
    %0 = vector.load %arg2[%c0, %c0_0] : memref<32x16xf32, #tpu.memory_space<vmem>>, vector<32x16xf32>
    %c0_1 = arith.constant 0 : index
    %c0_2 = arith.constant 0 : index
    %1 = vector.load %arg1[%c0_1, %c0_2] : memref<128x16xf32, #tpu.memory_space<vmem>>, vector<128x16xf32>
    %cst = arith.constant dense<0.000000e+00> : vector<32x128xf32>
    %2 = tpu.matmul %0, %1, %cst {dimension_numbers = #tpu.dot_dimension_numbers<[1], [1], [0], [0], [0, 0, 1, 0], [], []>} : vector<32x16xf32>, vector<128x16xf32>, vector<32x128xf32> -> vector<32x128xf32>
    %c0_3 = arith.constant 0 : index
    %c0_4 = arith.constant 0 : index
    %3 = vector.load %arg3[%c0_3, %c0_4] : memref<32x1xf32, #tpu.memory_space<vmem>>, vector<32x1xf32>
    %4 = vector.broadcast %3 : vector<32x1xf32> to vector<32x128xf32>
    %5 = arith.addf %2, %4 : vector<32x128xf32>
    %cst_5 = arith.constant 0.000000e+00 : f32
    %6 = vector.broadcast %cst_5 : f32 to vector<32x128xf32>
    %7 = arith.cmpf ogt, %5, %6 : vector<32x128xf32>
    %8 = math.exp %5 : vector<32x128xf32>
    %cst_6 = arith.constant 1.67326319 : f32
    %9 = vector.broadcast %cst_6 : f32 to vector<32x128xf32>
    %10 = arith.mulf %9, %8 : vector<32x128xf32>
    %cst_7 = arith.constant 1.67326319 : f32
    %11 = vector.broadcast %cst_7 : f32 to vector<32x128xf32>
    %12 = arith.subf %10, %11 : vector<32x128xf32>
    %13 = arith.select %7, %5, %12 : vector<32x128xi1>, vector<32x128xf32>
    %c0_8 = arith.constant 0 : index
    %c0_9 = arith.constant 0 : index
    %14 = vector.load %arg4[%c0_8, %c0_9] : memref<32x32xf32, #tpu.memory_space<vmem>>, vector<32x32xf32>
    %cst_10 = arith.constant dense<0.000000e+00> : vector<32x128xf32>
    %15 = tpu.matmul %14, %13, %cst_10 {dimension_numbers = #tpu.dot_dimension_numbers<[1], [0], [0], [1], [0, 0, 1, 1], [], []>} : vector<32x32xf32>, vector<32x128xf32>, vector<32x128xf32> -> vector<32x128xf32>
    %c0_11 = arith.constant 0 : index
    %c0_12 = arith.constant 0 : index
    %16 = vector.load %arg5[%c0_11, %c0_12] : memref<32x1xf32, #tpu.memory_space<vmem>>, vector<32x1xf32>
    %17 = vector.broadcast %16 : vector<32x1xf32> to vector<32x128xf32>
    %18 = arith.addf %15, %17 : vector<32x128xf32>
    %cst_13 = arith.constant 0.000000e+00 : f32
    %19 = vector.broadcast %cst_13 : f32 to vector<32x128xf32>
    %20 = arith.cmpf ogt, %18, %19 : vector<32x128xf32>
    %21 = math.exp %18 : vector<32x128xf32>
    %cst_14 = arith.constant 1.67326319 : f32
    %22 = vector.broadcast %cst_14 : f32 to vector<32x128xf32>
    %23 = arith.mulf %22, %21 : vector<32x128xf32>
    %cst_15 = arith.constant 1.67326319 : f32
    %24 = vector.broadcast %cst_15 : f32 to vector<32x128xf32>
    %25 = arith.subf %23, %24 : vector<32x128xf32>
    %26 = arith.select %20, %18, %25 : vector<32x128xi1>, vector<32x128xf32>
    %c0_16 = arith.constant 0 : index
    %c0_17 = arith.constant 0 : index
    %27 = vector.load %arg6[%c0_16, %c0_17] : memref<4x32xf32, #tpu.memory_space<vmem>>, vector<4x32xf32>
    %cst_18 = arith.constant dense<0.000000e+00> : vector<4x128xf32>
    %28 = tpu.matmul %27, %26, %cst_18 {dimension_numbers = #tpu.dot_dimension_numbers<[1], [0], [0], [1], [0, 0, 1, 1], [], []>} : vector<4x32xf32>, vector<32x128xf32>, vector<4x128xf32> -> vector<4x128xf32>
    %c0_19 = arith.constant 0 : index
    %c0_20 = arith.constant 0 : index
    %29 = vector.load %arg7[%c0_19, %c0_20] : memref<4x1xf32, #tpu.memory_space<vmem>>, vector<4x1xf32>
    %30 = vector.broadcast %29 : vector<4x1xf32> to vector<4x128xf32>
    %31 = arith.addf %28, %30 : vector<4x128xf32>
    %32 = math.tanh %31 : vector<4x128xf32>
    %c0_21 = arith.constant 0 : index
    %c0_22 = arith.constant 0 : index
    %33 = vector.load %arg8[%c0_21, %c0_22] : memref<4x1xf32, #tpu.memory_space<vmem>>, vector<4x1xf32>
    %34 = vector.broadcast %33 : vector<4x1xf32> to vector<4x128xf32>
    %35 = arith.mulf %32, %34 : vector<4x128xf32>
    %c0_23 = arith.constant 0 : index
    %c0_24 = arith.constant 0 : index
    %36 = vector.load %arg9[%c0_23, %c0_24] : memref<4x1xf32, #tpu.memory_space<vmem>>, vector<4x1xf32>
    %37 = vector.broadcast %36 : vector<4x1xf32> to vector<4x128xf32>
    %38 = arith.addf %35, %37 : vector<4x128xf32>
    %c0_25 = arith.constant 0 : index
    %c0_26 = arith.constant 0 : index
    %39 = vector.load %arg10[%c0_25, %c0_26] : memref<4x128xf32, #tpu.memory_space<vmem>>, vector<4x128xf32>
    tpu.vector_store %arg10[%c0_25, %c0_26], %38 {strides = array<i32>} : memref<4x128xf32, #tpu.memory_space<vmem>>, vector<4x128xf32>,
    return
  }
  func.func @transform_0(%arg0: i32) -> (i32, i32) {
    %c0_i32 = arith.constant 0 : i32
    %c0_i32_0 = arith.constant 0 : i32
    return %arg0, %c0_i32 : i32, i32
  }
  func.func @transform_1(%arg0: i32) -> (i32, i32) {
    %c0_i32 = arith.constant 0 : i32
    %c0_i32_0 = arith.constant 0 : i32
    %c0_i32_1 = arith.constant 0 : i32
    return %c0_i32, %c0_i32_0 : i32, i32
  }
  func.func @transform_2(%arg0: i32) -> (i32, i32) {
    %c0_i32 = arith.constant 0 : i32
    %c0_i32_0 = arith.constant 0 : i32
    %c0_i32_1 = arith.constant 0 : i32
    return %c0_i32, %c0_i32_0 : i32, i32
  }
  func.func @transform_3(%arg0: i32) -> (i32, i32) {
    %c0_i32 = arith.constant 0 : i32
    %c0_i32_0 = arith.constant 0 : i32
    %c0_i32_1 = arith.constant 0 : i32
    return %c0_i32, %c0_i32_0 : i32, i32
  }
  func.func @transform_4(%arg0: i32) -> (i32, i32) {
    %c0_i32 = arith.constant 0 : i32
    %c0_i32_0 = arith.constant 0 : i32
    %c0_i32_1 = arith.constant 0 : i32
    return %c0_i32, %c0_i32_0 : i32, i32
  }
  func.func @transform_5(%arg0: i32) -> (i32, i32) {
    %c0_i32 = arith.constant 0 : i32
    %c0_i32_0 = arith.constant 0 : i32
    %c0_i32_1 = arith.constant 0 : i32
    return %c0_i32, %c0_i32_0 : i32, i32
  }
  func.func @transform_6(%arg0: i32) -> (i32, i32) {
    %c0_i32 = arith.constant 0 : i32
    %c0_i32_0 = arith.constant 0 : i32
    %c0_i32_1 = arith.constant 0 : i32
    return %c0_i32, %c0_i32_0 : i32, i32
  }
  func.func @transform_7(%arg0: i32) -> (i32, i32) {
    %c0_i32 = arith.constant 0 : i32
    %c0_i32_0 = arith.constant 0 : i32
    %c0_i32_1 = arith.constant 0 : i32
    return %c0_i32, %c0_i32_0 : i32, i32
  }
  func.func @transform_8(%arg0: i32) -> (i32, i32) {
    %c0_i32 = arith.constant 0 : i32
    %c0_i32_0 = arith.constant 0 : i32
    %c0_i32_1 = arith.constant 0 : i32
    return %c0_i32, %c0_i32_0 : i32, i32
  }
  func.func @transform_9(%arg0: i32) -> (i32, i32) {
    %c0_i32 = arith.constant 0 : i32
    %c0_i32_0 = arith.constant 0 : i32
    return %c0_i32, %arg0 : i32, i32
  }
}

</mosaic_0001>

<llo_original>
// kernel: tpu_custom_call.1
$region0: #{tpu_custom_call.1}
  #allocation0 [shape = 'u32[]', space=smem, size = 0x4, offset = 0x4, fixed_abs, tag = 'smem constant byte address 0x4 - core index']
  #allocation1 [shape = 'u32[144,128]{1,0:T(1,128)}', space=vmem, size = 0x12000, scoped, tag = 'internal scratch']
  %s0 = inlined_call_operand.vmem [shape: f32[128,16], index: 0, kind: input, shape index: {}]
  %s1 = inlined_call_operand.vmem [shape: f32[32,16], index: 1, kind: input, shape index: {}]
  %s2 = inlined_call_operand.vmem [shape: f32[32,1], index: 2, kind: input, shape index: {}]
  %s3 = inlined_call_operand.vmem [shape: f32[32,32], index: 3, kind: input, shape index: {}]
  %s4 = inlined_call_operand.vmem [shape: f32[32,1], index: 4, kind: input, shape index: {}]
  %s5 = inlined_call_operand.vmem [shape: f32[4,32], index: 5, kind: input, shape index: {}]
  %s6 = inlined_call_operand.vmem [shape: f32[4,1], index: 6, kind: input, shape index: {}]
  %s7 = inlined_call_operand.vmem [shape: f32[4,1], index: 7, kind: input, shape index: {}]
  %s8 = inlined_call_operand.vmem [shape: f32[4,1], index: 8, kind: input, shape index: {}]
  %s9 = inlined_call_operand.hbm [shape: f32[4,128], index: 9, kind: output, shape index: {}]
  %s10 = sld [smem:[#allocation0]]
  $region46: #{tpu_custom_call.1} parent=0
    _
  %s12 = ssub.s32 1, %s10
  %s13 = scalar_select 0, %s12, %s10
  $region1: #{tpu_custom_call.1} parent=0
    #allocation2 [shape = 'u8[2048]{0}', space=vmem, size = 0x800, scoped, tag = 'output window, operand 0, single buffered']
    #allocation3 [shape = 's32[1]{0}', space=sflag, size = 0x4, scoped, tag = 'scoped memory for tpu_custom_call.1']
    %14 = vsyncpa [#allocation3], 0
    // Predicated region
    $region2: #{tpu_custom_call.1} parent=1 // pred_check
      _
    $region3: #{tpu_custom_call.1} parent=1 // pred_check_branch
      %16 = sbr.rel (0) target = $region5
    $region4: #{tpu_custom_call.1} parent=1 // pred_region
      _
    $region5: #{tpu_custom_call.1} parent=1 // pred_fallthru
      _
    // Predicated region
    $region6: #{tpu_custom_call.1} parent=1 // pred_check
      _
    $region7: #{tpu_custom_call.1} parent=1 // pred_check_branch
      %18 = sbr.rel (0) target = $region9
    $region8: #{tpu_custom_call.1} parent=1 // pred_region
      _
    $region9: #{tpu_custom_call.1} parent=1 // pred_fallthru
      _
    // Predicated region
    $region10: #{tpu_custom_call.1} parent=1 // pred_check
      _
    $region11: #{tpu_custom_call.1} parent=1 // pred_check_branch
      %20 = sbr.rel (0) target = $region13
    $region12: #{tpu_custom_call.1} parent=1 // pred_region
      _
    $region13: #{tpu_custom_call.1} parent=1 // pred_fallthru
      _
    // Predicated region
    $region14: #{tpu_custom_call.1} parent=1 // pred_check
      _
    $region15: #{tpu_custom_call.1} parent=1 // pred_check_branch
      %22 = sbr.rel (0) target = $region17
    $region16: #{tpu_custom_call.1} parent=1 // pred_region
      _
    $region17: #{tpu_custom_call.1} parent=1 // pred_fallthru
      _
    // Predicated region
    $region18: #{tpu_custom_call.1} parent=1 // pred_check
      _
    $region19: #{tpu_custom_call.1} parent=1 // pred_check_branch
      %24 = sbr.rel (0) target = $region21
    $region20: #{tpu_custom_call.1} parent=1 // pred_region
      _
    $region21: #{tpu_custom_call.1} parent=1 // pred_fallthru
      _
    // Predicated region
    $region22: #{tpu_custom_call.1} parent=1 // pred_check
      _
    $region23: #{tpu_custom_call.1} parent=1 // pred_check_branch
      %26 = sbr.rel (0) target = $region25
    $region24: #{tpu_custom_call.1} parent=1 // pred_region
      _
    $region25: #{tpu_custom_call.1} parent=1 // pred_fallthru
      _
    // Predicated region
    $region26: #{tpu_custom_call.1} parent=1 // pred_check
      _
    $region27: #{tpu_custom_call.1} parent=1 // pred_check_branch
      %28 = sbr.rel (0) target = $region29
    $region28: #{tpu_custom_call.1} parent=1 // pred_region
      _
    $region29: #{tpu_custom_call.1} parent=1 // pred_fallthru
      _
    // Predicated region
    $region30: #{tpu_custom_call.1} parent=1 // pred_check
      _
    $region31: #{tpu_custom_call.1} parent=1 // pred_check_branch
      %30 = sbr.rel (0) target = $region33
    $region32: #{tpu_custom_call.1} parent=1 // pred_region
      _
    $region33: #{tpu_custom_call.1} parent=1 // pred_fallthru
      _
    // Predicated region
    $region34: #{tpu_custom_call.1} parent=1 // pred_check
      _
    $region35: #{tpu_custom_call.1} parent=1 // pred_check_branch
      %32 = sbr.rel (0) target = $region37
    $region36: #{tpu_custom_call.1} parent=1 // pred_region
      _
    $region37: #{tpu_custom_call.1} parent=1 // pred_fallthru
      _
    %v33 = vld [vmem:[%s1] sm:$0xff]
    %v34 = vld [vmem:[%s1 + $0x8] sm:$0xff]
    %v35 = vld [vmem:[%s1 + $0x10] sm:$0xff]
    %v36 = vld [vmem:[%s1 + $0x18] sm:$0xff]
    %v37 = vld [vmem:[%s0] sm:$0xff]
    %v38 = vld [vmem:[%s0 + $0x8] sm:$0xff]
    %v39 = vld [vmem:[%s0 + $0x10] sm:$0xff]
    %v40 = vld [vmem:[%s0 + $0x18] sm:$0xff]
    %v41 = vld [vmem:[%s0 + $0x20] sm:$0xff]
    %v42 = vld [vmem:[%s0 + $0x28] sm:$0xff]
    %v43 = vld [vmem:[%s0 + $0x30] sm:$0xff]
    %v44 = vld [vmem:[%s0 + $0x38] sm:$0xff]
    %v45 = vld [vmem:[%s0 + $0x40] sm:$0xff]
    %v46 = vld [vmem:[%s0 + $0x48] sm:$0xff]
    %v47 = vld [vmem:[%s0 + $0x50] sm:$0xff]
    %v48 = vld [vmem:[%s0 + $0x58] sm:$0xff]
    %v49 = vld [vmem:[%s0 + $0x60] sm:$0xff]
    %v50 = vld [vmem:[%s0 + $0x68] sm:$0xff]
    %v51 = vld [vmem:[%s0 + $0x70] sm:$0xff]
    %v52 = vld [vmem:[%s0 + $0x78] sm:$0xff]
    %v53 = vld [vmem:[%s2] sm:$0xff]
    %v54 = vld [vmem:[%s2 + $0x8] sm:$0xff]
    %v55 = vld [vmem:[%s2 + $0x10] sm:$0xff]
    %v56 = vld [vmem:[%s2 + $0x18] sm:$0xff]
    %58 = vset.pattern.permute.xlu0 0
    %59 = vperm.xlu0 %58, %v53
    %v60 = vpop.permute.xlu0 %59
    %63 = vset.pattern.permute.xlu0 0
    %64 = vperm.xlu0 %63, %v54
    %v65 = vpop.permute.xlu0 %64
    %68 = vset.pattern.permute.xlu0 0
    %69 = vperm.xlu0 %68, %v55
    %v70 = vpop.permute.xlu0 %69
    %73 = vset.pattern.permute.xlu0 0
    %74 = vperm.xlu0 %73, %v56
    %v75 = vpop.permute.xlu0 %74
    %vm77 = vcmask 130048
    %v79 = vsel %vm77, %v33, 0
    %v82 = vsel %vm77, %v34, 0
    %v85 = vsel %vm77, %v35, 0
    %v88 = vsel %vm77, %v36, 0
    %v91 = vsel %vm77, %v37, 0
    %v94 = vsel %vm77, %v38, 0
    %v97 = vsel %vm77, %v39, 0
    %v100 = vsel %vm77, %v40, 0
    %v103 = vsel %vm77, %v41, 0
    %v106 = vsel %vm77, %v42, 0
    %v109 = vsel %vm77, %v43, 0
    %v112 = vsel %vm77, %v44, 0
    %v115 = vsel %vm77, %v45, 0
    %v118 = vsel %vm77, %v46, 0
    %v121 = vsel %vm77, %v47, 0
    %v124 = vsel %vm77, %v48, 0
    %v127 = vsel %vm77, %v49, 0
    %v130 = vsel %vm77, %v50, 0
    %v133 = vsel %vm77, %v51, 0
    %v136 = vsel %vm77, %v52, 0
    %138 = vmatprep.subr.mxu0 0.0
    %139 = vmatpush1.xpose.msra.mxu0 %v91
    %140 = vmatprep.subr.mxu0 0.0
    %141 = vmatpush1.xpose.msra.mxu0 %v94
    %142 = vmatprep.subr.mxu0 0.0
    %143 = vmatpush1.xpose.msra.mxu0 %v97
    %144 = vmatprep.subr.mxu0 0.0
    %145 = vmatpush1.xpose.msra.mxu0 %v100
    %146 = vmatprep.subr.mxu0 0.0
    %147 = vmatpush1.xpose.msra.mxu0 %v103
    %148 = vmatprep.subr.mxu0 0.0
    %149 = vmatpush1.xpose.msra.mxu0 %v106
    %150 = vmatprep.subr.mxu0 0.0
    %151 = vmatpush1.xpose.msra.mxu0 %v109
    %152 = vmatprep.subr.mxu0 0.0
    %153 = vmatpush1.xpose.msra.mxu0 %v112
    %154 = vmatprep.subr.mxu0 0.0
    %155 = vmatpush1.xpose.msra.mxu0 %v115
    %156 = vmatprep.subr.mxu0 0.0
    %157 = vmatpush1.xpose.msra.mxu0 %v118
    %158 = vmatprep.subr.mxu0 0.0
    %159 = vmatpush1.xpose.msra.mxu0 %v121
    %160 = vmatprep.subr.mxu0 0.0
    %161 = vmatpush1.xpose.msra.mxu0 %v124
    %162 = vmatprep.subr.mxu0 0.0
    %163 = vmatpush1.xpose.msra.mxu0 %v127
    %164 = vmatprep.subr.mxu0 0.0
    %165 = vmatpush1.xpose.msra.mxu0 %v130
    %166 = vmatprep.subr.mxu0 0.0
    %167 = vmatpush1.xpose.msra.mxu0 %v133
    %168 = vmatprep.subr.mxu0 0.0
    %169 = vmatpush1.xpose.msra.mxu0 %v136
    %170 = vmatprep.subr.mxu0 0.0
    %171 = vmatpush1.xpose.msra.mxu0 0.0
    %172 = vmatprep.subr.mxu0 0.0
    %173 = vmatpush1.xpose.msra.mxu0 0.0
    %174 = vmatprep.subr.mxu0 0.0
    %175 = vmatpush1.xpose.msra.mxu0 0.0
    %176 = vmatprep.subr.mxu0 0.0
    %177 = vmatpush1.xpose.msra.mxu0 0.0
    %178 = vmatprep.subr.mxu0 0.0
    %179 = vmatpush1.xpose.msra.mxu0 0.0
    %180 = vmatprep.subr.mxu0 0.0
    %181 = vmatpush1.xpose.msra.mxu0 0.0
    %182 = vmatprep.subr.mxu0 0.0
    %183 = vmatpush1.xpose.msra.mxu0 0.0
    %184 = vmatprep.subr.mxu0 0.0
    %185 = vmatpush1.xpose.msra.mxu0 0.0
    %186 = vmatprep.subr.mxu0 0.0
    %187 = vmatpush1.xpose.msra.mxu0 0.0
    %188 = vmatprep.subr.mxu0 0.0
    %189 = vmatpush1.xpose.msra.mxu0 0.0
    %190 = vmatprep.subr.mxu0 0.0
    %191 = vmatpush1.xpose.msra.mxu0 0.0
    %192 = vmatprep.subr.mxu0 0.0
    %193 = vmatpush1.xpose.msra.mxu0 0.0
    %194 = vmatprep.subr.mxu0 0.0
    %195 = vmatpush1.xpose.msra.mxu0 0.0
    %196 = vmatprep.subr.mxu0 0.0
    %197 = vmatpush1.xpose.msra.mxu0 0.0
    %198 = vmatprep.subr.mxu0 0.0
    %199 = vmatpush1.xpose.msra.mxu0 0.0
    %200 = vmatprep.subr.mxu0 0.0
    %201 = vmatpush1.xpose.msra.mxu0 0.0
    %202 = vmatprep.mubr.f32.mxu0 0.0
    %203 = vmatmul.mubr.f32.gmra.mrb[0].mxu0 %v79
    %v204 = vpop.f32.mrb[0].mxu0
    %v205 = vadd.f32 %v60, %v204
    %v206 = vpop.f32.mrb[0].mxu0
    %207 = vmatprep.mubr.f32.mxu0 0.0
    %208 = vmatmul.mubr.f32.gmra.mrb[0].mxu0 %v82
    %v209 = vpop.f32.mrb[0].mxu0
    %v210 = vadd.f32 %v65, %v209
    %v211 = vpop.f32.mrb[0].mxu0
    %212 = vmatprep.mubr.f32.mxu0 0.0
    %213 = vmatmul.mubr.f32.gmra.mrb[0].mxu0 %v85
    %v214 = vpop.f32.mrb[0].mxu0
    %v215 = vadd.f32 %v70, %v214
    %v216 = vpop.f32.mrb[0].mxu0
    %217 = vmatprep.mubr.f32.mxu0 0.0
    %218 = vmatmul.mubr.f32.gmra.mrb[0].mxu0 %v88
    %v219 = vpop.f32.mrb[0].mxu0
    %v220 = vadd.f32 %v75, %v219
    %v221 = vpop.f32.mrb[0].mxu0
    %222 = vdwg.mxu0
    %vm223 = vcmp.gt.f32.partialorder %v205, 0.0
    %vm224 = vcmp.gt.f32.partialorder %v210, 0.0
    %vm225 = vcmp.gt.f32.partialorder %v215, 0.0
    %vm226 = vcmp.gt.f32.partialorder %v220, 0.0
    %v227 = vmul.f32 %v205, 1.442695
    %v228 = vpow.pop %v227
    %v229 = vmul.f32 %v210, 1.442695
    %v230 = vpow.pop %v229
    %v231 = vmul.f32 %v215, 1.442695
    %v232 = vpow.pop %v231
    %v233 = vmul.f32 %v220, 1.442695
    %v234 = vpow.pop %v233
    %v235 = vmul.f32 %v228, 1.6732632
    %v236 = vmul.f32 %v230, 1.6732632
    %v237 = vmul.f32 %v232, 1.6732632
    %v238 = vmul.f32 %v234, 1.6732632
    %v239 = vsub.f32 %v235, 1.6732632
    %v240 = vsub.f32 %v236, 1.6732632
    %v241 = vsub.f32 %v237, 1.6732632
    %v242 = vsub.f32 %v238, 1.6732632
    %v243 = vsel %vm223, %v205, %v239
    %v244 = vsel %vm224, %v210, %v240
    %v245 = vsel %vm225, %v215, %v241
    %v246 = vsel %vm226, %v220, %v242
    %v247 = vld [vmem:[%s3] sm:$0xff]
    %v248 = vld [vmem:[%s3 + $0x8] sm:$0xff]
    %v249 = vld [vmem:[%s3 + $0x10] sm:$0xff]
    %v250 = vld [vmem:[%s3 + $0x18] sm:$0xff]
    %v251 = vld [vmem:[%s4] sm:$0xff]
    %v252 = vld [vmem:[%s4 + $0x8] sm:$0xff]
    %v253 = vld [vmem:[%s4 + $0x10] sm:$0xff]
    %v254 = vld [vmem:[%s4 + $0x18] sm:$0xff]
    %256 = vset.pattern.permute.xlu0 0
    %257 = vperm.xlu0 %256, %v251
    %v258 = vpop.permute.xlu0 %257
    %261 = vset.pattern.permute.xlu0 0
    %262 = vperm.xlu0 %261, %v252
    %v263 = vpop.permute.xlu0 %262
    %266 = vset.pattern.permute.xlu0 0
    %267 = vperm.xlu0 %266, %v253
    %v268 = vpop.permute.xlu0 %267
    %271 = vset.pattern.permute.xlu0 0
    %272 = vperm.xlu0 %271, %v254
    %v273 = vpop.permute.xlu0 %272
    %vm275 = vcmask 261120
    %v277 = vsel %vm275, %v247, 0
    %v280 = vsel %vm275, %v248, 0
    %v283 = vsel %vm275, %v249, 0
    %v286 = vsel %vm275, %v250, 0
    %288 = vmatprep.subr.mxu0 0.0
    %289 = vmatpush1.msra.mxu0 %v243
    %290 = vmatprep.subr.mxu0 0.0
    %291 = vmatpush1.msra.mxu0 %v244
    %292 = vmatprep.subr.mxu0 0.0
    %293 = vmatpush1.msra.mxu0 %v245
    %294 = vmatprep.subr.mxu0 0.0
    %295 = vmatpush1.msra.mxu0 %v246
    %296 = vmatprep.subr.mxu0 0.0
    %297 = vmatpush1.msra.mxu0 0.0
    %298 = vmatprep.subr.mxu0 0.0
    %299 = vmatpush1.msra.mxu0 0.0
    %300 = vmatprep.subr.mxu0 0.0
    %301 = vmatpush1.msra.mxu0 0.0
    %302 = vmatprep.subr.mxu0 0.0
    %303 = vmatpush1.msra.mxu0 0.0
    %304 = vmatprep.subr.mxu0 0.0
    %305 = vmatpush1.msra.mxu0 0.0
    %306 = vmatprep.subr.mxu0 0.0
    %307 = vmatpush1.msra.mxu0 0.0
    %308 = vmatprep.subr.mxu0 0.0
    %309 = vmatpush1.msra.mxu0 0.0
    %310 = vmatprep.subr.mxu0 0.0
    %311 = vmatpush1.msra.mxu0 0.0
    %312 = vmatprep.subr.mxu0 0.0
    %313 = vmatpush1.msra.mxu0 0.0
    %314 = vmatprep.subr.mxu0 0.0
    %315 = vmatpush1.msra.mxu0 0.0
    %316 = vmatprep.subr.mxu0 0.0
    %317 = vmatpush1.msra.mxu0 0.0
    %318 = vmatprep.subr.mxu0 0.0
    %319 = vmatpush1.msra.mxu0 0.0
    %320 = vmatprep.subr.mxu0 0.0
    %321 = vmatpush1.msra.mxu0 0.0
    %322 = vmatprep.subr.mxu0 0.0
    %323 = vmatpush1.msra.mxu0 0.0
    %324 = vmatprep.subr.mxu0 0.0
    %325 = vmatpush1.msra.mxu0 0.0
    %326 = vmatprep.subr.mxu0 0.0
    %327 = vmatpush1.msra.mxu0 0.0
    %328 = vmatprep.subr.mxu0 0.0
    %329 = vmatpush1.msra.mxu0 0.0
    %330 = vmatprep.subr.mxu0 0.0
    %331 = vmatpush1.msra.mxu0 0.0
    %332 = vmatprep.subr.mxu0 0.0
    %333 = vmatpush1.msra.mxu0 0.0
    %334 = vmatprep.subr.mxu0 0.0
    %335 = vmatpush1.msra.mxu0 0.0
    %336 = vmatprep.subr.mxu0 0.0
    %337 = vmatpush1.msra.mxu0 0.0
    %338 = vmatprep.subr.mxu0 0.0
    %339 = vmatpush1.msra.mxu0 0.0
    %340 = vmatprep.subr.mxu0 0.0
    %341 = vmatpush1.msra.mxu0 0.0
    %342 = vmatprep.subr.mxu0 0.0
    %343 = vmatpush1.msra.mxu0 0.0
    %344 = vmatprep.subr.mxu0 0.0
    %345 = vmatpush1.msra.mxu0 0.0
    %346 = vmatprep.subr.mxu0 0.0
    %347 = vmatpush1.msra.mxu0 0.0
    %348 = vmatprep.subr.mxu0 0.0
    %349 = vmatpush1.msra.mxu0 0.0
    %350 = vmatprep.subr.mxu0 0.0
    %351 = vmatpush1.msra.mxu0 0.0
    %352 = vmatprep.mubr.f32.mxu0 0.0
    %353 = vmatmul.mubr.f32.gmra.mrb[0].mxu0 %v277
    %v354 = vpop.f32.mrb[0].mxu0
    %v355 = vadd.f32 %v258, %v354
    %v356 = vpop.f32.mrb[0].mxu0
    %357 = vmatprep.mubr.f32.mxu0 0.0
    %358 = vmatmul.mubr.f32.gmra.mrb[0].mxu0 %v280
    %v359 = vpop.f32.mrb[0].mxu0
    %v360 = vadd.f32 %v263, %v359
    %v361 = vpop.f32.mrb[0].mxu0
    %362 = vmatprep.mubr.f32.mxu0 0.0
    %363 = vmatmul.mubr.f32.gmra.mrb[0].mxu0 %v283
    %v364 = vpop.f32.mrb[0].mxu0
    %v365 = vadd.f32 %v268, %v364
    %v366 = vpop.f32.mrb[0].mxu0
    %367 = vmatprep.mubr.f32.mxu0 0.0
    %368 = vmatmul.mubr.f32.gmra.mrb[0].mxu0 %v286
    %v369 = vpop.f32.mrb[0].mxu0
    %v370 = vadd.f32 %v273, %v369
    %v371 = vpop.f32.mrb[0].mxu0
    %372 = vdwg.mxu0
    %vm373 = vcmp.gt.f32.partialorder %v355, 0.0
    %vm374 = vcmp.gt.f32.partialorder %v360, 0.0
    %vm375 = vcmp.gt.f32.partialorder %v365, 0.0
    %vm376 = vcmp.gt.f32.partialorder %v370, 0.0
    %v377 = vmul.f32 %v355, 1.442695
    %v378 = vpow.pop %v377
    %v379 = vmul.f32 %v360, 1.442695
    %v380 = vpow.pop %v379
    %v381 = vmul.f32 %v365, 1.442695
    %v382 = vpow.pop %v381
    %v383 = vmul.f32 %v370, 1.442695
    %v384 = vpow.pop %v383
    %v385 = vmul.f32 %v378, 1.6732632
    %v386 = vmul.f32 %v380, 1.6732632
    %v387 = vmul.f32 %v382, 1.6732632
    %v388 = vmul.f32 %v384, 1.6732632
    %v389 = vsub.f32 %v385, 1.6732632
    %v390 = vsub.f32 %v386, 1.6732632
    %v391 = vsub.f32 %v387, 1.6732632
    %v392 = vsub.f32 %v388, 1.6732632
    %v393 = vsel %vm373, %v355, %v389
    %v394 = vsel %vm374, %v360, %v390
    %v395 = vsel %vm375, %v365, %v391
    %v396 = vsel %vm376, %v370, %v392
    %v397 = vld [vmem:[%s5] sm:$0xf]
    %v398 = vld [vmem:[%s6] sm:$0xf]
    %400 = vset.pattern.permute.xlu0 0
    %401 = vperm.xlu0 %400, %v398
    %v402 = vpop.permute.xlu0 %401
    %v405 = vsel %vm275, %v397, 0
    %407 = vmatprep.subr.mxu0 0.0
    %408 = vmatpush1.msra.mxu0 %v393
    %409 = vmatprep.subr.mxu0 0.0
    %410 = vmatpush1.msra.mxu0 %v394
    %411 = vmatprep.subr.mxu0 0.0
    %412 = vmatpush1.msra.mxu0 %v395
    %413 = vmatprep.subr.mxu0 0.0
    %414 = vmatpush1.msra.mxu0 %v396
    %415 = vmatprep.subr.mxu0 0.0
    %416 = vmatpush1.msra.mxu0 0.0
    %417 = vmatprep.subr.mxu0 0.0
    %418 = vmatpush1.msra.mxu0 0.0
    %419 = vmatprep.subr.mxu0 0.0
    %420 = vmatpush1.msra.mxu0 0.0
    %421 = vmatprep.subr.mxu0 0.0
    %422 = vmatpush1.msra.mxu0 0.0
    %423 = vmatprep.subr.mxu0 0.0
    %424 = vmatpush1.msra.mxu0 0.0
    %425 = vmatprep.subr.mxu0 0.0
    %426 = vmatpush1.msra.mxu0 0.0
    %427 = vmatprep.subr.mxu0 0.0
    %428 = vmatpush1.msra.mxu0 0.0
    %429 = vmatprep.subr.mxu0 0.0
    %430 = vmatpush1.msra.mxu0 0.0
    %431 = vmatprep.subr.mxu0 0.0
    %432 = vmatpush1.msra.mxu0 0.0
    %433 = vmatprep.subr.mxu0 0.0
    %434 = vmatpush1.msra.mxu0 0.0
    %435 = vmatprep.subr.mxu0 0.0
    %436 = vmatpush1.msra.mxu0 0.0
    %437 = vmatprep.subr.mxu0 0.0
    %438 = vmatpush1.msra.mxu0 0.0
    %439 = vmatprep.subr.mxu0 0.0
    %440 = vmatpush1.msra.mxu0 0.0
    %441 = vmatprep.subr.mxu0 0.0
    %442 = vmatpush1.msra.mxu0 0.0
    %443 = vmatprep.subr.mxu0 0.0
    %444 = vmatpush1.msra.mxu0 0.0
    %445 = vmatprep.subr.mxu0 0.0
    %446 = vmatpush1.msra.mxu0 0.0
    %447 = vmatprep.subr.mxu0 0.0
    %448 = vmatpush1.msra.mxu0 0.0
    %449 = vmatprep.subr.mxu0 0.0
    %450 = vmatpush1.msra.mxu0 0.0
    %451 = vmatprep.subr.mxu0 0.0
    %452 = vmatpush1.msra.mxu0 0.0
    %453 = vmatprep.subr.mxu0 0.0
    %454 = vmatpush1.msra.mxu0 0.0
    %455 = vmatprep.subr.mxu0 0.0
    %456 = vmatpush1.msra.mxu0 0.0
    %457 = vmatprep.subr.mxu0 0.0
    %458 = vmatpush1.msra.mxu0 0.0
    %459 = vmatprep.subr.mxu0 0.0
    %460 = vmatpush1.msra.mxu0 0.0
    %461 = vmatprep.subr.mxu0 0.0
    %462 = vmatpush1.msra.mxu0 0.0
    %463 = vmatprep.subr.mxu0 0.0
    %464 = vmatpush1.msra.mxu0 0.0
    %465 = vmatprep.subr.mxu0 0.0
    %466 = vmatpush1.msra.mxu0 0.0
    %467 = vmatprep.subr.mxu0 0.0
    %468 = vmatpush1.msra.mxu0 0.0
    %469 = vmatprep.subr.mxu0 0.0
    %470 = vmatpush1.msra.mxu0 0.0
    %471 = vmatprep.mubr.f32.mxu0 0.0
    %472 = vmatmul.mubr.f32.gmra.mrb[0].mxu0 %v405
    %v473 = vpop.f32.mrb[0].mxu0
    %v474 = vadd.f32 %v402, %v473
    %v475 = vpop.f32.mrb[0].mxu0
    %476 = vdwg.mxu0
    %v477 = vtanh.pop %v474
    %v478 = vld [vmem:[%s7] sm:$0xf]
    %480 = vset.pattern.permute.xlu0 0
    %481 = vperm.xlu0 %480, %v478
    %v482 = vpop.permute.xlu0 %481
    %v484 = vmul.f32 %v477, %v482
    %v485 = vld [vmem:[%s8] sm:$0xf]
    %487 = vset.pattern.permute.xlu0 0
    %488 = vperm.xlu0 %487, %v485
    %v489 = vpop.permute.xlu0 %488
    %v491 = vadd.f32 %v484, %v489
    %492 = vst [vmem:[#allocation2] sm:$0xf] %v491
    // Predicated region
    $region38: #{tpu_custom_call.1} parent=1 // pred_check
      _
    $region39: #{tpu_custom_call.1} parent=1 // pred_check_branch
      %494 = sbr.rel (0) target = $region41
    $region40: #{tpu_custom_call.1} parent=1 // pred_region
      %s496 = ssub.s32 64, 64
      %497 = vsyncadd [#allocation3], %s496
      %s499 = sshll.u32 [#allocation2], 4
      %s500 = int_to_ptr.vmem [resolvable:$true] %s499
      %502 = dma.vmem_to_hbm [thread:$0]  %s500, 64, %s9, [#allocation3]
    $region41: #{tpu_custom_call.1} parent=1 // pred_fallthru
      _
    // Predicated region
    $region42: #{tpu_custom_call.1} parent=1 // pred_check
      _
    $region43: #{tpu_custom_call.1} parent=1 // pred_check_branch
      %504 = sbr.rel (0) target = $region45
    $region44: #{tpu_custom_call.1} parent=1 // pred_region
      %505 = dma.done [#allocation3], 64
    $region45: #{tpu_custom_call.1} parent=1 // pred_fallthru
      _
    %506 = vsyncpa [#allocation3], 1

</llo_original>
